<compile_context>
chip_gen: v6e
topology: v6e:2x2x1
jax: 0.10.0
libtpu: 0.0.40
codegen_flags: <defaults>
</compile_context>

<pallas_src>
import numpy as np
import jax
import jax.numpy as jnp
from jax.experimental import pallas as pl
from jax.experimental.pallas import tpu as pltpu


def _ldam_partial_kernel(logits_ref, target_ref, m_ref, w_ref, out_ref):
    # logits_ref: (C, TM)  logits, class-major (any float dtype)
    # target_ref: (1, TM)  int32 target class; -1 marks padded columns
    # m_ref:      (C, 1)   f32, m_list * s (pre-scaled on host)
    # w_ref:      (C, 1)   f32 per-class weights (ones when weighting disabled)
    # out_ref:    (8, 128) f32 partial block: row0 = sum(w_i*nll_i), row1 = sum(w_i)
    x = logits_ref[...].astype(jnp.float32)            # (C, TM)
    tgt = target_ref[...]                               # (1, TM)
    m_s = m_ref[...]                                     # (C, 1)
    w = w_ref[...]                                       # (C, 1)

    C, TM = x.shape
    cls_idx = jax.lax.broadcasted_iota(jnp.int32, (C, TM), 0)
    onehot = cls_idx == tgt                              # (C, TM)

    # where(onehot, x - m_list[target]*s, x): at (c, j) with c == target_j the
    # margin is just m_s[c], so no per-sample gather / one-hot matmul needed.
    x_final = jnp.where(onehot, x - m_s, x)

    # Cross-entropy at the target column, without materializing logp.
    mx = jnp.max(x_final, axis=0, keepdims=True)                         # (1, TM)
    lse = jnp.log(jnp.sum(jnp.exp(x_final - mx), axis=0, keepdims=True))  # (1, TM)
    x_tgt = jnp.sum(jnp.where(onehot, x_final, 0.0), axis=0, keepdims=True)
    w_i = jnp.sum(jnp.where(onehot, w, 0.0), axis=0, keepdims=True)       # 0 on pad cols

    nll = (mx + lse) - x_tgt                                              # (1, TM)

    num = jnp.sum(w_i * nll)          # tile partial numerator
    den = jnp.sum(w_i)                # tile partial denominator

    row = jax.lax.broadcasted_iota(jnp.int32, (8, 128), 0)
    blk = jnp.where(row == 0, num, 0.0)
    blk = jnp.where(row == 1, den, blk)
    out_ref[...] = blk


def _pick_tile(n, c, itemsize):
    # Keep one logits tile <= ~4 MiB: the pipeline double-buffers every input,
    # and v7x has only 64 MiB physical / 32 MiB default-scoped VMEM.
    budget = 4 * 1024 * 1024
    cap = max(128, (budget // max(1, c * itemsize)) // 128 * 128)
    tm = min(cap, 8 * 1024)
    tm = min(tm, max(128, ((n + 127) // 128) * 128))
    return int(tm)


def ldam_loss_pallas(logits, target, m_list, per_cls_weights, s, tm=None):
    """logits: [N, C] float, target: [N] int, m_list: [C] f32,
    per_cls_weights: [C] f32 or None, s: python float."""
    N, C = logits.shape
    if per_cls_weights is None:
        per_cls_weights = jnp.ones((C,), jnp.float32)

    if tm is None:
        tm = _pick_tile(N, C, jnp.dtype(logits.dtype).itemsize)
    grid = (N + tm - 1) // tm
    n_pad = grid * tm - N

    # Class-major (lane-dense) layout; pad the batch to a tile multiple. Padded
    # columns carry target = -1 -> onehot all-false -> w_i = 0 -> zero weight.
    # TODO(synk): if the producer can emit [C, N] (or bf16) directly, this
    # wrapper transpose/pad becomes free layout plumbing.
    logits_t = logits.T
    target_i = target.astype(jnp.int32)
    if n_pad:
        logits_t = jnp.pad(logits_t, ((0, 0), (0, n_pad)))
        target_i = jnp.pad(target_i, ((0, n_pad),), constant_values=-1)
    target2d = target_i.reshape(1, grid * tm)
    m2d = (m_list.astype(jnp.float32) * jnp.float32(s)).reshape(C, 1)
    w2d = per_cls_weights.astype(jnp.float32).reshape(C, 1)

    bytes_accessed = (logits_t.size * logits_t.dtype.itemsize
                      + target2d.size * 4 + (2 * C + grid * 8 * 128) * 4)
    cost = pl.CostEstimate(flops=10 * grid * tm * C,
                           transcendentals=grid * tm * (C + 1),
                           bytes_accessed=int(bytes_accessed))

    partials = pl.pallas_call(
        _ldam_partial_kernel,
        out_shape=jax.ShapeDtypeStruct((grid * 8, 128), jnp.float32),
        grid_spec=pltpu.PrefetchScalarGridSpec(
            num_scalar_prefetch=0,
            grid=(grid,),
            in_specs=[
                pl.BlockSpec((C, tm), lambda i: (0, i)),   # logits tile (pipelined)
                pl.BlockSpec((1, tm), lambda i: (0, i)),   # target tile
                pl.BlockSpec((C, 1), lambda i: (0, 0)),    # m_list * s (resident)
                pl.BlockSpec((C, 1), lambda i: (0, 0)),    # per-class weights (resident)
            ],
            out_specs=pl.BlockSpec((8, 128), lambda i: (i, 0)),
        ),
        compiler_params=pltpu.CompilerParams(
            dimension_semantics=("parallel",),   # shards tiles across v7x's 2 TCs
            vmem_limit_bytes=32 * 1024 * 1024,
        ),
        cost_estimate=cost,
    )(logits_t, target2d, m2d, w2d)

    parts = partials.reshape(grid, 8, 128)
    num = jnp.sum(parts[:, 0, 0])
    den = jnp.sum(parts[:, 1, 0])
    # Weighted-mean reduction, identical to F.cross_entropy(weight=...):
    # sum(w_i*nll)/sum(w_i) (NaN if all selected class weights are zero,
    # exactly like PyTorch).
    return num / den


def ldam_loss_ref(logits, target, m_list, per_cls_weights, s):
    N, C = logits.shape
    if per_cls_weights is None:
        per_cls_weights = jnp.ones((C,), jnp.float32)
    onehot = jax.nn.one_hot(target, C, dtype=jnp.float32)
    batch_m = onehot @ m_list.reshape(C, 1)                     # (N, 1)
    x_final = jnp.where(onehot > 0, logits - batch_m * s, logits)
    logp = jax.nn.log_softmax(x_final, axis=-1)
    nll = -jnp.sum(onehot * logp, axis=-1)
    w_i = onehot @ per_cls_weights
    return jnp.sum(w_i * nll) / jnp.sum(w_i)


if __name__ == "__main__":
    # ---- deterministic parameter setup (mirrors LDAMLoss.__init__) ----
    cls_num_list = [100, 50, 20, 10, 5, 2, 100, 30, 15, 8]   # C = 10 classes
    max_m = 0.5
    s = 30.0
    m_np = 1.0 / np.sqrt(np.sqrt(np.asarray(cls_num_list, np.float64)))
    m_np = m_np * (max_m / np.max(m_np))
    m_list = jnp.asarray(m_np, jnp.float32)
    per_cls_weights = None  # reweight_epoch == -1 path

    # ---- small deterministic inputs ----
    N, C = 8, len(cls_num_list)
    key = jax.random.PRNGKey(0)
    k1, k2 = jax.random.split(key)
    logits = jax.random.normal(k1, (N, C), jnp.float32) * 3.0
    target = jax.random.randint(k2, (N,), 0, C, jnp.int32)

    loss = ldam_loss_pallas(logits, target, m_list, per_cls_weights, s)
    jax.block_until_ready(loss)

    ref = ldam_loss_ref(logits, target, m_list, per_cls_weights, s)
    assert np.allclose(np.asarray(loss), np.asarray(ref), rtol=2e-5, atol=1e-4), (
        f"mismatch: pallas={loss} ref={ref}")

    print("KERNEL_OK")
</pallas_src>

<mosaic_0001>
module attributes {stable_mosaic.version = 11 : i64} {
  func.func @_ldam_partial_kernel(%arg0: i32, %arg1: memref<10x128xf32, #tpu.memory_space<vmem>>, %arg2: memref<1x128xi32, #tpu.memory_space<vmem>>, %arg3: memref<10x1xf32, #tpu.memory_space<vmem>>, %arg4: memref<10x1xf32, #tpu.memory_space<vmem>>, %arg5: memref<8x128xf32, #tpu.memory_space<vmem>>) attributes {dimension_semantics = [#tpu.dimension_semantics<parallel>], iteration_bounds = array<i64: 1>, scalar_prefetch = 0 : i64, scratch_operands = 0 : i64, tpu.core_type = #tpu.core_type<tc>, window_params = [{transform_indices = @transform_0, window_bounds = array<i64: 10, 128>}, {transform_indices = @transform_1, window_bounds = array<i64: 1, 128>}, {pipeline_mode = #tpu.pipeline_mode<synchronous>, transform_indices = @transform_2, window_bounds = array<i64: 10, 1>}, {pipeline_mode = #tpu.pipeline_mode<synchronous>, transform_indices = @transform_3, window_bounds = array<i64: 10, 1>}, {transform_indices = @transform_4, window_bounds = array<i64: 8, 128>}]} {
    %c0 = arith.constant 0 : index
    %c0_0 = arith.constant 0 : index
    %0 = vector.load %arg1[%c0, %c0_0] : memref<10x128xf32, #tpu.memory_space<vmem>>, vector<10x128xf32>
    %c0_1 = arith.constant 0 : index
    %c0_2 = arith.constant 0 : index
    %1 = vector.load %arg2[%c0_1, %c0_2] : memref<1x128xi32, #tpu.memory_space<vmem>>, vector<1x128xi32>
    %c0_3 = arith.constant 0 : index
    %c0_4 = arith.constant 0 : index
    %2 = vector.load %arg3[%c0_3, %c0_4] : memref<10x1xf32, #tpu.memory_space<vmem>>, vector<10x1xf32>
    %c0_5 = arith.constant 0 : index
    %c0_6 = arith.constant 0 : index
    %3 = vector.load %arg4[%c0_5, %c0_6] : memref<10x1xf32, #tpu.memory_space<vmem>>, vector<10x1xf32>
    %4 = tpu.iota {dimensions = array<i32: 0>} : vector<10x128xi32>
    %5 = vector.broadcast %1 : vector<1x128xi32> to vector<10x128xi32>
    %6 = arith.cmpi eq, %4, %5 : vector<10x128xi32>
    %7 = vector.broadcast %2 : vector<10x1xf32> to vector<10x128xf32>
    %8 = arith.subf %0, %7 : vector<10x128xf32>
    %9 = arith.select %6, %8, %0 : vector<10x128xi1>, vector<10x128xf32>
    %cst = arith.constant dense<0xFF800000> : vector<128xf32>
    %10 = vector.multi_reduction <maximumf>, %9, %cst [0] : vector<10x128xf32> to vector<128xf32>
    %11 = vector.shape_cast %10 : vector<128xf32> to vector<1x128xf32>
    %12 = vector.broadcast %11 : vector<1x128xf32> to vector<10x128xf32>
    %13 = arith.subf %9, %12 : vector<10x128xf32>
    %14 = math.exp %13 : vector<10x128xf32>
    %cst_7 = arith.constant dense<0.000000e+00> : vector<128xf32>
    %15 = vector.multi_reduction <add>, %14, %cst_7 [0] : vector<10x128xf32> to vector<128xf32>
    %16 = vector.shape_cast %15 : vector<128xf32> to vector<1x128xf32>
    %17 = math.log %16 : vector<1x128xf32>
    %cst_8 = arith.constant 0.000000e+00 : f32
    %18 = vector.broadcast %cst_8 : f32 to vector<10x128xf32>
    %19 = arith.select %6, %9, %18 : vector<10x128xi1>, vector<10x128xf32>
    %cst_9 = arith.constant dense<0.000000e+00> : vector<128xf32>
    %20 = vector.multi_reduction <add>, %19, %cst_9 [0] : vector<10x128xf32> to vector<128xf32>
    %21 = vector.shape_cast %20 : vector<128xf32> to vector<1x128xf32>
    %cst_10 = arith.constant 0.000000e+00 : f32
    %22 = vector.shape_cast %3 : vector<10x1xf32> to vector<10x1xf32>
    %23 = vector.broadcast %22 : vector<10x1xf32> to vector<10x128xf32>
    %24 = vector.broadcast %cst_10 : f32 to vector<10x128xf32>
    %25 = arith.select %6, %23, %24 : vector<10x128xi1>, vector<10x128xf32>
    %cst_11 = arith.constant dense<0.000000e+00> : vector<128xf32>
    %26 = vector.multi_reduction <add>, %25, %cst_11 [0] : vector<10x128xf32> to vector<128xf32>
    %27 = vector.shape_cast %26 : vector<128xf32> to vector<1x128xf32>
    %28 = arith.addf %11, %17 : vector<1x128xf32>
    %29 = arith.subf %28, %21 : vector<1x128xf32>
    %30 = arith.mulf %27, %29 : vector<1x128xf32>
    %31 = vector.shape_cast %30 : vector<1x128xf32> to vector<1x1x128xf32>
    %cst_12 = arith.constant dense<0.000000e+00> : vector<1xf32>
    %32 = vector.multi_reduction <add>, %31, %cst_12 [1, 2] : vector<1x1x128xf32> to vector<1xf32>
    %33 = vector.shape_cast %32 : vector<1xf32> to vector<1x1x1xf32>
    %34 = vector.extract %33[0, 0, 0] : f32 from vector<1x1x1xf32>
    %35 = vector.shape_cast %27 : vector<1x128xf32> to vector<1x1x128xf32>
    %cst_13 = arith.constant dense<0.000000e+00> : vector<1xf32>
    %36 = vector.multi_reduction <add>, %35, %cst_13 [1, 2] : vector<1x1x128xf32> to vector<1xf32>
    %37 = vector.shape_cast %36 : vector<1xf32> to vector<1x1x1xf32>
    %38 = vector.extract %37[0, 0, 0] : f32 from vector<1x1x1xf32>
    %39 = tpu.iota {dimensions = array<i32: 0>} : vector<8x128xi32>
    %c0_i32 = arith.constant 0 : i32
    %40 = vector.broadcast %c0_i32 : i32 to vector<8x128xi32>
    %41 = arith.cmpi eq, %39, %40 : vector<8x128xi32>
    %cst_14 = arith.constant 0.000000e+00 : f32
    %42 = vector.broadcast %34 : f32 to vector<8x128xf32>
    %43 = vector.broadcast %cst_14 : f32 to vector<8x128xf32>
    %44 = arith.select %41, %42, %43 : vector<8x128xi1>, vector<8x128xf32>
    %c1_i32 = arith.constant 1 : i32
    %45 = vector.broadcast %c1_i32 : i32 to vector<8x128xi32>
    %46 = arith.cmpi eq, %39, %45 : vector<8x128xi32>
    %47 = vector.broadcast %38 : f32 to vector<8x128xf32>
    %48 = arith.select %46, %47, %44 : vector<8x128xi1>, vector<8x128xf32>
    %c0_15 = arith.constant 0 : index
    %c0_16 = arith.constant 0 : index
    %49 = vector.load %arg5[%c0_15, %c0_16] : memref<8x128xf32, #tpu.memory_space<vmem>>, vector<8x128xf32>
    tpu.vector_store %arg5[%c0_15, %c0_16], %48 {strides = array<i32>} : memref<8x128xf32, #tpu.memory_space<vmem>>, vector<8x128xf32>,
    return
  }
  func.func @transform_0(%arg0: i32) -> (i32, i32) {
    %c0_i32 = arith.constant 0 : i32
    %c0_i32_0 = arith.constant 0 : i32
    return %c0_i32, %arg0 : i32, i32
  }
  func.func @transform_1(%arg0: i32) -> (i32, i32) {
    %c0_i32 = arith.constant 0 : i32
    %c0_i32_0 = arith.constant 0 : i32
    return %c0_i32, %arg0 : i32, i32
  }
  func.func @transform_2(%arg0: i32) -> (i32, i32) {
    %c0_i32 = arith.constant 0 : i32
    %c0_i32_0 = arith.constant 0 : i32
    %c0_i32_1 = arith.constant 0 : i32
    return %c0_i32, %c0_i32_0 : i32, i32
  }
  func.func @transform_3(%arg0: i32) -> (i32, i32) {
    %c0_i32 = arith.constant 0 : i32
    %c0_i32_0 = arith.constant 0 : i32
    %c0_i32_1 = arith.constant 0 : i32
    return %c0_i32, %c0_i32_0 : i32, i32
  }
  func.func @transform_4(%arg0: i32) -> (i32, i32) {
    %c0_i32 = arith.constant 0 : i32
    %c0_i32_0 = arith.constant 0 : i32
    return %arg0, %c0_i32 : i32, i32
  }
}

</mosaic_0001>

<llo_original>
// kernel: tpu_custom_call.1
$region0: #{tpu_custom_call.1}
  #allocation0 [shape = 'u32[]', space=smem, size = 0x4, offset = 0x4, fixed_abs, tag = 'smem constant byte address 0x4 - core index']
  #allocation1 [shape = 'u32[144,128]{1,0:T(1,128)}', space=vmem, size = 0x12000, scoped, tag = 'internal scratch']
  %s0 = inlined_call_operand.vmem [shape: f32[10,128], index: 0, kind: input, shape index: {}]
  %s1 = inlined_call_operand.vmem [shape: s32[1,128], index: 1, kind: input, shape index: {}]
  %s2 = inlined_call_operand.vmem [shape: f32[10,1], index: 2, kind: input, shape index: {}]
  %s3 = inlined_call_operand.vmem [shape: f32[10,1], index: 3, kind: input, shape index: {}]
  %s4 = inlined_call_operand.hbm [shape: f32[8,128], index: 4, kind: output, shape index: {}]
  %s5 = sld [smem:[#allocation0]]
  $region26: #{tpu_custom_call.1} parent=0
    _
  %s7 = ssub.s32 1, %s5
  %s8 = scalar_select 0, %s7, %s5
  $region1: #{tpu_custom_call.1} parent=0
    #allocation2 [shape = 'u8[4096]{0}', space=vmem, size = 0x1000, scoped, tag = 'output window, operand 0, single buffered']
    #allocation3 [shape = 's32[1]{0}', space=sflag, size = 0x4, scoped, tag = 'scoped memory for tpu_custom_call.1']
    %9 = vsyncpa [#allocation3], 0
    // Predicated region
    $region2: #{tpu_custom_call.1} parent=1 // pred_check
      _
    $region3: #{tpu_custom_call.1} parent=1 // pred_check_branch
      %11 = sbr.rel (0) target = $region5
    $region4: #{tpu_custom_call.1} parent=1 // pred_region
      _
    $region5: #{tpu_custom_call.1} parent=1 // pred_fallthru
      _
    // Predicated region
    $region6: #{tpu_custom_call.1} parent=1 // pred_check
      _
    $region7: #{tpu_custom_call.1} parent=1 // pred_check_branch
      %13 = sbr.rel (0) target = $region9
    $region8: #{tpu_custom_call.1} parent=1 // pred_region
      _
    $region9: #{tpu_custom_call.1} parent=1 // pred_fallthru
      _
    // Predicated region
    $region10: #{tpu_custom_call.1} parent=1 // pred_check
      _
    $region11: #{tpu_custom_call.1} parent=1 // pred_check_branch
      %15 = sbr.rel (0) target = $region13
    $region12: #{tpu_custom_call.1} parent=1 // pred_region
      _
    $region13: #{tpu_custom_call.1} parent=1 // pred_fallthru
      _
    // Predicated region
    $region14: #{tpu_custom_call.1} parent=1 // pred_check
      _
    $region15: #{tpu_custom_call.1} parent=1 // pred_check_branch
      %17 = sbr.rel (0) target = $region17
    $region16: #{tpu_custom_call.1} parent=1 // pred_region
      _
    $region17: #{tpu_custom_call.1} parent=1 // pred_fallthru
      _
    %v18 = vld [vmem:[%s0] sm:$0xff]
    %v19 = vld [vmem:[%s0 + $0x8] sm:$0x3]
    %v20 = vld [vmem:[%s1] sm:$0x1]
    %v21 = vld [vmem:[%s2] sm:$0xff]
    %v22 = vld [vmem:[%s2 + $0x8] sm:$0x3]
    %v23 = vld [vmem:[%s3] sm:$0xff]
    %v24 = vld [vmem:[%s3 + $0x8] sm:$0x3]
    %v25 = vlaneseq
    %v26 = vshrl.u32 %v25, 7
    %v27 = vadd.s32 %v26, 8
    %v28 = vlaneseq
    %v29 = vshrl.u32 %v28, 7
    %v30 = vsub.s32 0, %v29
    %v31 = vrot.slane %v20, %v30
    %vm32 = vcmp.eq.s32.totalorder %v26, %v31
    %vm33 = vcmp.eq.s32.totalorder %v27, %v31
    %35 = vset.pattern.permute.xlu0 0
    %36 = vperm.xlu0 %35, %v21
    %v37 = vpop.permute.xlu0 %36
    %40 = vset.pattern.permute.xlu0 0
    %41 = vperm.xlu0 %40, %v22
    %v42 = vpop.permute.xlu0 %41
    %v44 = vsub.f32 %v18, %v37
    %v45 = vsub.f32 %v19, %v42
    %v46 = vsel %vm32, %v44, %v18
    %v47 = vsel %vm33, %v45, %v19
    %vm48 = vcmask 1041408
    %v49 = vsel %vm48, %v47, -inf
    %v50 = vmax.f32 %v46, %v49
    %v51 = vrot.slane %v50, 4
    %v52 = vmax.f32 %v50, %v51
    %v53 = vrot.slane %v52, 2
    %v54 = vmax.f32 %v52, %v53
    %v55 = vrot.slane %v54, 1
    %v56 = vmax.f32 %v54, %v55
    %v57 = vsub.f32 %v46, %v56
    %v58 = vsub.f32 %v47, %v56
    %v59 = vmul.f32 %v57, 1.442695
    %v60 = vpow.pop %v59
    %v61 = vmul.f32 %v58, 1.442695
    %v62 = vpow.pop %v61
    %v63 = vsel %vm48, %v62, 0.0
    %v64 = vadd.f32 %v60, %v63
    %v65 = vrot.slane %v64, 4
    %v66 = vadd.f32 %v64, %v65
    %v67 = vrot.slane %v66, 2
    %v68 = vadd.f32 %v66, %v67
    %v69 = vrot.slane %v68, 1
    %v70 = vadd.f32 %v68, %v69
    %v71 = vlog2.pop %v70
    %v72 = vmul.f32 %v71, 0.6931472
    %v73 = vsel %vm32, %v44, 0.0
    %v74 = vsel %vm33, %v45, 0.0
    %v75 = vsel %vm48, %v74, 0.0
    %v76 = vadd.f32 %v73, %v75
    %v77 = vrot.slane %v76, 4
    %v78 = vadd.f32 %v76, %v77
    %v79 = vrot.slane %v78, 2
    %v80 = vadd.f32 %v78, %v79
    %v81 = vrot.slane %v80, 1
    %v82 = vadd.f32 %v80, %v81
    %84 = vset.pattern.permute.xlu0 0
    %85 = vperm.xlu0 %84, %v23
    %v86 = vpop.permute.xlu0 %85
    %89 = vset.pattern.permute.xlu0 0
    %90 = vperm.xlu0 %89, %v24
    %v91 = vpop.permute.xlu0 %90
    %v93 = vsel %vm32, %v86, 0.0
    %v94 = vsel %vm33, %v91, 0.0
    %v95 = vsel %vm48, %v94, 0.0
    %v96 = vadd.f32 %v93, %v95
    %v97 = vrot.slane %v96, 4
    %v98 = vadd.f32 %v96, %v97
    %v99 = vrot.slane %v98, 2
    %v100 = vadd.f32 %v98, %v99
    %v101 = vrot.slane %v100, 1
    %v102 = vadd.f32 %v100, %v101
    %v103 = vadd.f32 %v56, %v72
    %v104 = vsub.f32 %v103, %v82
    %v105 = vmul.f32 %v102, %v104
    %vm106 = vcmask 1040384
    %v107 = vsel %vm106, %v105, 0.0
    %108 = vadd.xlane.f32.xlu0 %v107
    %v109 = vpop.xlane.xlu0 %108
    %v110 = vrot.slane %v109, 4
    %v111 = vadd.f32 %v109, %v110
    %v112 = vrot.slane %v111, 2
    %v113 = vadd.f32 %v111, %v112
    %v114 = vrot.slane %v113, 1
    %v115 = vadd.f32 %v113, %v114
    %s116 = vtos %v115
    %v117 = vsel %vm106, %v102, 0.0
    %118 = vadd.xlane.f32.xlu0 %v117
    %v119 = vpop.xlane.xlu0 %118
    %v120 = vrot.slane %v119, 4
    %v121 = vadd.f32 %v119, %v120
    %v122 = vrot.slane %v121, 2
    %v123 = vadd.f32 %v121, %v122
    %v124 = vrot.slane %v123, 1
    %v125 = vadd.f32 %v123, %v124
    %s126 = vtos %v125
    %vm127 = vcmp.eq.s32.totalorder %v26, 0
    %v128 = vstv %s116
    %v129 = vsel %vm127, %v128, 0.0
    %vm130 = vcmp.eq.s32.totalorder %v26, 1
    %v131 = vstv %s126
    %v132 = vsel %vm130, %v131, %v129
    %133 = vst [vmem:[#allocation2] sm:$0xff] %v132
    // Predicated region
    $region18: #{tpu_custom_call.1} parent=1 // pred_check
      _
    $region19: #{tpu_custom_call.1} parent=1 // pred_check_branch
      %135 = sbr.rel (0) target = $region21
    $region20: #{tpu_custom_call.1} parent=1 // pred_region
      %s137 = ssub.s32 128, 128
      %138 = vsyncadd [#allocation3], %s137
      %s140 = sshll.u32 [#allocation2], 4
      %s141 = int_to_ptr.vmem [resolvable:$true] %s140
      %143 = dma.vmem_to_hbm [thread:$0]  %s141, 128, %s4, [#allocation3]
    $region21: #{tpu_custom_call.1} parent=1 // pred_fallthru
      _
    // Predicated region
    $region22: #{tpu_custom_call.1} parent=1 // pred_check
      _
    $region23: #{tpu_custom_call.1} parent=1 // pred_check_branch
      %145 = sbr.rel (0) target = $region25
    $region24: #{tpu_custom_call.1} parent=1 // pred_region
      %146 = dma.done [#allocation3], 128
    $region25: #{tpu_custom_call.1} parent=1 // pred_fallthru
      _
    %147 = vsyncpa [#allocation3], 1

</llo_original>
